<compile_context>
chip_gen: v7x
topology: tpu7x:2x2x1
jax: 0.10.0
libtpu: 0.0.40
codegen_flags: <defaults>
</compile_context>

<pallas_src>
import functools

import jax
import jax.numpy as jnp
from jax.experimental import pallas as pl
from jax.experimental.pallas import tpu as pltpu


def _cdiv(a, b):
    return (a + b - 1) // b


def _round_up(x, m):
    return ((x + m - 1) // m) * m


def _sublane(dtype):
    # Sublane packing: 8 rows for 4-byte, 16 for 2-byte, 32 for 1-byte dtypes.
    return {4: 8, 2: 16, 1: 32}.get(jnp.dtype(dtype).itemsize, 8)


def _vmem_capacity_bytes():
    try:
        return int(pltpu.get_tpu_info().vmem_capacity_bytes)
    except Exception:
        return 64 * 1024 * 1024  # conservative default (v7x per-TC VMEM)


def prepare_linear_params(weight, bias):
    """One-time parameter prep (hoisted out of the per-call path).

    weight: (num_labels, dim), bias: (num_labels,)
    Returns K-major, lane-dense (128-padded) RHS and f32 bias row:
      w_t: (dim, n_pad), b2d: (1, n_pad)  with zero in the padded label columns.
    """
    num_labels, dim = weight.shape
    n_pad = _round_up(num_labels, 128)
    w_t = jnp.zeros((dim, n_pad), dtype=weight.dtype).at[:, :num_labels].set(weight.T)
    b2d = jnp.zeros((1, n_pad), dtype=jnp.float32).at[:, :num_labels].set(
        bias.astype(jnp.float32)[None, :])
    return w_t, b2d


def _linear_kernel(x_ref, w_ref, b_ref, o_ref, acc_ref):
    # x_ref: (TM, TK)  w_ref: (TK, N_pad)  b_ref: (1, N_pad)  f32
    # o_ref: (TM, N_pad)  acc_ref: (TM, N_pad) f32 scratch
    k = pl.program_id(1)

    @pl.when(k == 0)
    def _():
        acc_ref[...] = jnp.zeros_like(acc_ref)

    # Canonical (M,K)x(K,N) dot — feeds the MXU directly, no in-kernel transpose.
    acc_ref[...] += jnp.dot(x_ref[...], w_ref[...],
                            preferred_element_type=jnp.float32)

    @pl.when(k == pl.num_programs(1) - 1)
    def _():
        o_ref[...] = (acc_ref[...] + b_ref[...]).astype(o_ref.dtype)


def linear_classifier_forward(x, w_t, b2d, *, num_labels, tm_max=512):
    """x: (B, ...) flattened like torch .view; w_t/b2d from prepare_linear_params."""
    B = x.shape[0]
    x2d = x.reshape(B, -1)                      # torch: x.view(x.size(0), -1)
    dim = x2d.shape[1]
    n_pad = w_t.shape[1]
    assert w_t.shape[0] == dim and b2d.shape == (1, n_pad)

    out_dtype = x2d.dtype
    x_item = jnp.dtype(x2d.dtype).itemsize
    w_item = jnp.dtype(w_t.dtype).itemsize
    o_item = jnp.dtype(out_dtype).itemsize

    # ---- batch (M) tiling: dtype-aware sublane rounding, no host-side batch padding ----
    sub = _sublane(x2d.dtype)
    tm_max = max(_round_up(tm_max, sub), sub)   # guard non-multiple-of-sublane tm_max
    nm = _cdiv(B, tm_max)
    if nm < 2 and B >= 2 * max(256, sub):
        nm = 2                                  # >=2 grid steps: both v7x TCs + DMA overlap
    tm = min(_round_up(_cdiv(B, max(nm, 1)), sub), _round_up(B, sub))
    nm = _cdiv(B, tm)                           # ragged last block handled by Pallas

    vmem_cap = _vmem_capacity_bytes()
    budget = int(0.6 * vmem_cap)

    # ---- K (dim) tiling only when the resident footprint would blow the VMEM budget ----
    def footprint(tk):
        return (2 * tm * tk * x_item            # x tile, double-buffered
                + 2 * tk * n_pad * w_item       # weight block (counted double-buffered)
                + 2 * tm * n_pad * o_item       # out tile, double-buffered
                + tm * n_pad * 4                # f32 accumulator scratch
                + 2 * n_pad * 4)                # bias

    tk = dim
    if footprint(dim) > budget and dim % 128 == 0:
        # Largest multiple-of-128 *divisor* of dim that fits (exact divisor => no OOB
        # K-block garbage ever enters the accumulator).
        cands = [c for c in range(dim - 128, 0, -128) if dim % c == 0]
        for c in cands:
            if footprint(c) <= budget:
                tk = c
                break
        else:
            if cands:
                tk = cands[-1]
        # TODO(synk): if dim is huge and not divisible by 128 we fall back to tk=dim.
    nk = _cdiv(dim, tk)

    needed = footprint(tk)
    vmem_limit = int(min(max(needed + needed // 4, 32 * 1024 * 1024),
                         int(0.85 * vmem_cap)))

    cost = pl.CostEstimate(
        flops=2 * B * dim * n_pad,
        transcendentals=0,
        bytes_accessed=(B * dim * x_item + dim * n_pad * w_item
                        + B * n_pad * o_item + n_pad * 4),
    )

    out_padded = pl.pallas_call(
        _linear_kernel,
        out_shape=jax.ShapeDtypeStruct((B, n_pad), out_dtype),
        grid_spec=pltpu.PrefetchScalarGridSpec(
            num_scalar_prefetch=0,
            grid=(nm, nk),
            in_specs=[
                pl.BlockSpec((tm, tk), lambda i, k: (i, k)),      # x tile (pipelined)
                pl.BlockSpec((tk, n_pad), lambda i, k: (k, 0)),   # weight (constant over i)
                pl.BlockSpec((1, n_pad), lambda i, k: (0, 0)),    # bias (VMEM-resident)
            ],
            out_specs=pl.BlockSpec((tm, n_pad), lambda i, k: (i, 0)),
            scratch_shapes=[pltpu.VMEM((tm, n_pad), jnp.float32)],
        ),
        compiler_params=pltpu.CompilerParams(
            dimension_semantics=("parallel", "arbitrary"),  # batch parallel, K reduction last
            vmem_limit_bytes=vmem_limit,
        ),
        cost_estimate=cost,
    )(x2d, w_t, b2d)

    # Drop padded label columns (padded columns are exactly zero-weight + zero-bias).
    return out_padded[:, :num_labels]


if __name__ == "__main__":
    # Small, deterministic example consistent with the module's forward:
    # frozen features x of shape (B, C, H, W) = (2, 4, 4, 2) -> dim = 32
    key = jax.random.PRNGKey(0)
    kx, kw = jax.random.split(key)

    B, C, H, W = 2, 4, 4, 2
    dim = C * H * W          # 32
    num_labels = 10

    x = jax.random.normal(kx, (B, C, H, W), dtype=jnp.float32)

    # Matches LinearClassifier.__init__: weight ~ N(0, 0.01), bias = 0
    weight = 0.01 * jax.random.normal(kw, (num_labels, dim), dtype=jnp.float32)
    bias = jnp.zeros((num_labels,), dtype=jnp.float32)

    # One-time parameter prep (transpose + 128-pad), outside the per-call path.
    w_t, b2d = prepare_linear_params(weight, bias)

    fwd = jax.jit(functools.partial(linear_classifier_forward, num_labels=num_labels))
    out = jax.block_until_ready(fwd(x, w_t, b2d))

    # Sanity check against plain-JAX reference.
    ref = x.reshape(B, -1) @ weight.T + bias
    assert out.shape == (B, num_labels)
    assert jnp.allclose(out, ref, atol=1e-5), "mismatch vs reference"

    print("KERNEL_OK")
</pallas_src>

<mosaic_0001>
module attributes {stable_mosaic.version = 11 : i64} {
  func.func @_linear_kernel(%arg0: i32, %arg1: i32, %arg2: memref<8x32xf32, #tpu.memory_space<vmem>>, %arg3: memref<32x128xf32, #tpu.memory_space<vmem>>, %arg4: memref<1x128xf32, #tpu.memory_space<vmem>>, %arg5: memref<8x128xf32, #tpu.memory_space<vmem>>, %arg6: memref<8x128xf32, #tpu.memory_space<vmem>>) attributes {dimension_semantics = [#tpu.dimension_semantics<parallel>, #tpu.dimension_semantics<arbitrary>], iteration_bounds = array<i64: 1, 1>, scalar_prefetch = 0 : i64, scratch_operands = 1 : i64, tpu.core_type = #tpu.core_type<tc>, window_params = [{transform_indices = @transform_0, window_bounds = array<i64: 8, 32>}, {transform_indices = @transform_1, window_bounds = array<i64: 32, 128>}, {pipeline_mode = #tpu.pipeline_mode<synchronous>, transform_indices = @transform_2, window_bounds = array<i64: 1, 128>}, {transform_indices = @transform_3, window_bounds = array<i64: 8, 128>}]} {
    %c0_i32 = arith.constant 0 : i32
    %0 = arith.cmpi eq, %arg1, %c0_i32 : i32
    %1 = arith.extui %0 : i1 to i32
    %c0_i32_0 = arith.constant 0 : i32
    %2 = arith.cmpi ne, %1, %c0_i32_0 : i32
    scf.if %2 {
      %cst_10 = arith.constant 0.000000e+00 : f32
      %12 = vector.broadcast %cst_10 : f32 to vector<8x128xf32>
      %c0_11 = arith.constant 0 : index
      %c0_12 = arith.constant 0 : index
      %13 = vector.load %arg6[%c0_11, %c0_12] : memref<8x128xf32, #tpu.memory_space<vmem>>, vector<8x128xf32>
      tpu.vector_store %arg6[%c0_11, %c0_12], %12 {strides = array<i32>} : memref<8x128xf32, #tpu.memory_space<vmem>>, vector<8x128xf32>,
    } else {
    }
    %c0 = arith.constant 0 : index
    %c0_1 = arith.constant 0 : index
    %3 = vector.load %arg6[%c0, %c0_1] : memref<8x128xf32, #tpu.memory_space<vmem>>, vector<8x128xf32>
    %c0_2 = arith.constant 0 : index
    %c0_3 = arith.constant 0 : index
    %4 = vector.load %arg2[%c0_2, %c0_3] : memref<8x32xf32, #tpu.memory_space<vmem>>, vector<8x32xf32>
    %c0_4 = arith.constant 0 : index
    %c0_5 = arith.constant 0 : index
    %5 = vector.load %arg3[%c0_4, %c0_5] : memref<32x128xf32, #tpu.memory_space<vmem>>, vector<32x128xf32>
    %cst = arith.constant dense<0.000000e+00> : vector<8x128xf32>
    %6 = tpu.matmul %4, %5, %cst {dimension_numbers = #tpu.dot_dimension_numbers<[1], [0], [0], [1], [0, 0, 1, 1], [], []>} : vector<8x32xf32>, vector<32x128xf32>, vector<8x128xf32> -> vector<8x128xf32>
    %7 = arith.addf %3, %6 : vector<8x128xf32>
    %c0_6 = arith.constant 0 : index
    %c0_7 = arith.constant 0 : index
    %8 = vector.load %arg6[%c0_6, %c0_7] : memref<8x128xf32, #tpu.memory_space<vmem>>, vector<8x128xf32>
    tpu.vector_store %arg6[%c0_6, %c0_7], %7 {strides = array<i32>} : memref<8x128xf32, #tpu.memory_space<vmem>>, vector<8x128xf32>,
    %c0_i32_8 = arith.constant 0 : i32
    %9 = arith.cmpi eq, %arg1, %c0_i32_8 : i32
    %10 = arith.extui %9 : i1 to i32
    %c0_i32_9 = arith.constant 0 : i32
    %11 = arith.cmpi ne, %10, %c0_i32_9 : i32
    scf.if %11 {
      %c0_10 = arith.constant 0 : index
      %c0_11 = arith.constant 0 : index
      %12 = vector.load %arg6[%c0_10, %c0_11] : memref<8x128xf32, #tpu.memory_space<vmem>>, vector<8x128xf32>
      %c0_12 = arith.constant 0 : index
      %c0_13 = arith.constant 0 : index
      %13 = vector.load %arg4[%c0_12, %c0_13] : memref<1x128xf32, #tpu.memory_space<vmem>>, vector<1x128xf32>
      %14 = vector.broadcast %13 : vector<1x128xf32> to vector<8x128xf32>
      %15 = arith.addf %12, %14 : vector<8x128xf32>
      %c0_14 = arith.constant 0 : index
      %c0_15 = arith.constant 0 : index
      %16 = vector.load %arg5[%c0_14, %c0_15] : memref<8x128xf32, #tpu.memory_space<vmem>>, vector<8x128xf32>
      tpu.vector_store %arg5[%c0_14, %c0_15], %15 {strides = array<i32>} : memref<8x128xf32, #tpu.memory_space<vmem>>, vector<8x128xf32>,
    } else {
    }
    return
  }
  func.func @transform_0(%arg0: i32, %arg1: i32) -> (i32, i32) {
    %c0_i32 = arith.constant 0 : i32
    return %arg0, %arg1 : i32, i32
  }
  func.func @transform_1(%arg0: i32, %arg1: i32) -> (i32, i32) {
    %c0_i32 = arith.constant 0 : i32
    %c0_i32_0 = arith.constant 0 : i32
    return %arg1, %c0_i32 : i32, i32
  }
  func.func @transform_2(%arg0: i32, %arg1: i32) -> (i32, i32) {
    %c0_i32 = arith.constant 0 : i32
    %c0_i32_0 = arith.constant 0 : i32
    %c0_i32_1 = arith.constant 0 : i32
    return %c0_i32, %c0_i32_0 : i32, i32
  }
  func.func @transform_3(%arg0: i32, %arg1: i32) -> (i32, i32) {
    %c0_i32 = arith.constant 0 : i32
    %c0_i32_0 = arith.constant 0 : i32
    return %arg0, %c0_i32 : i32, i32
  }
}

</mosaic_0001>

<llo_original>
// kernel: linear_classifier_forward.1
$region0: #{linear_classifier_forward.1}
  #allocation0 [shape = 'u32[]', space=smem, size = 0x4, offset = 0x4, fixed_abs, tag = 'smem constant byte address 0x4 - core index']
  #allocation1 [shape = 'u32[144,128]{1,0:T(1,128)}', space=vmem, size = 0x12000, scoped, tag = 'internal scratch']
  #allocation2 [shape = 'f32[8,128]{1,0:T(8,128)}', space=vmem, size = 0x1000, scoped, tag = 'scratch operand']
  %s0 = inlined_call_operand.vmem [shape: f32[2,32], index: 0, kind: input, shape index: {}]
  %s1 = inlined_call_operand.vmem [shape: f32[32,128], index: 1, kind: input, shape index: {}]
  %s2 = inlined_call_operand.vmem [shape: f32[1,128], index: 2, kind: input, shape index: {}]
  %s3 = inlined_call_operand.hbm [shape: f32[2,128], index: 3, kind: output, shape index: {}]
  %s4 = sld [smem:[#allocation0]]
  $region30: #{linear_classifier_forward.1} parent=0
    _
  %s6 = ssub.s32 1, %s4
  %s7 = scalar_select 0, %s6, %s4
  $region1: #{linear_classifier_forward.1} parent=0
    #allocation3 [shape = 'u8[4096]{0}', space=vmem, size = 0x1000, scoped, tag = 'output window, operand 0, single buffered']
    #allocation4 [shape = 's32[1]{0}', space=sflag, size = 0x4, scoped, tag = 'scoped memory for linear_classifier_forward.1']
    %8 = vsyncpa [#allocation4], 0
    // Predicated region
    $region2: #{linear_classifier_forward.1} parent=1 // pred_check
      _
    $region3: #{linear_classifier_forward.1} parent=1 // pred_check_branch
      %10 = sbr.rel (0) target = $region5
    $region4: #{linear_classifier_forward.1} parent=1 // pred_region
      _
    $region5: #{linear_classifier_forward.1} parent=1 // pred_fallthru
      _
    // Predicated region
    $region6: #{linear_classifier_forward.1} parent=1 // pred_check
      _
    $region7: #{linear_classifier_forward.1} parent=1 // pred_check_branch
      %12 = sbr.rel (0) target = $region9
    $region8: #{linear_classifier_forward.1} parent=1 // pred_region
      _
    $region9: #{linear_classifier_forward.1} parent=1 // pred_fallthru
      _
    // Predicated region
    $region10: #{linear_classifier_forward.1} parent=1 // pred_check
      _
    $region11: #{linear_classifier_forward.1} parent=1 // pred_check_branch
      %14 = sbr.rel (0) target = $region13
    $region12: #{linear_classifier_forward.1} parent=1 // pred_region
      _
    $region13: #{linear_classifier_forward.1} parent=1 // pred_fallthru
      _
    %p15 = scmp.eq.s32.totalorder 0, 0
    // Predicated region
    $region14: #{linear_classifier_forward.1} parent=1 // pred_check
      %p16 = pneg %p15
    $region15: #{linear_classifier_forward.1} parent=1 // pred_check_branch
      %18 = sbr.rel (%p16) target = $region17
    $region16: #{linear_classifier_forward.1} parent=1 // pred_region
      %19 = vst [vmem:[#allocation2] sm:$0xff] 0.0
    $region17: #{linear_classifier_forward.1} parent=1 // pred_fallthru
      _
    %v20 = vld [vmem:[#allocation2] sm:$0xff]
    %v21 = vld [vmem:[%s0] sm:$0xff]
    %v22 = vld [vmem:[%s1] sm:$0xff]
    %v23 = vld [vmem:[%s1 + $0x8] sm:$0xff]
    %v24 = vld [vmem:[%s1 + $0x10] sm:$0xff]
    %v25 = vld [vmem:[%s1 + $0x18] sm:$0xff]
    %vm26 = vcmask 261120
    %v28 = vsel %vm26, %v21, 0
    %30 = vmatprep.subr.mxu0 0.0
    %31 = vmatpush1.msra.mxu0 %v22
    %32 = vmatprep.subr.mxu0 0.0
    %33 = vmatpush1.msra.mxu0 %v23
    %34 = vmatprep.subr.mxu0 0.0
    %35 = vmatpush1.msra.mxu0 %v24
    %36 = vmatprep.subr.mxu0 0.0
    %37 = vmatpush1.msra.mxu0 %v25
    %38 = vmatprep.subr.mxu0 0.0
    %39 = vmatpush1.msra.mxu0 0.0
    %40 = vmatprep.subr.mxu0 0.0
    %41 = vmatpush1.msra.mxu0 0.0
    %42 = vmatprep.subr.mxu0 0.0
    %43 = vmatpush1.msra.mxu0 0.0
    %44 = vmatprep.subr.mxu0 0.0
    %45 = vmatpush1.msra.mxu0 0.0
    %46 = vmatprep.subr.mxu0 0.0
    %47 = vmatpush1.msra.mxu0 0.0
    %48 = vmatprep.subr.mxu0 0.0
    %49 = vmatpush1.msra.mxu0 0.0
    %50 = vmatprep.subr.mxu0 0.0
    %51 = vmatpush1.msra.mxu0 0.0
    %52 = vmatprep.subr.mxu0 0.0
    %53 = vmatpush1.msra.mxu0 0.0
    %54 = vmatprep.subr.mxu0 0.0
    %55 = vmatpush1.msra.mxu0 0.0
    %56 = vmatprep.subr.mxu0 0.0
    %57 = vmatpush1.msra.mxu0 0.0
    %58 = vmatprep.subr.mxu0 0.0
    %59 = vmatpush1.msra.mxu0 0.0
    %60 = vmatprep.subr.mxu0 0.0
    %61 = vmatpush1.msra.mxu0 0.0
    %62 = vmatprep.subr.mxu0 0.0
    %63 = vmatpush1.msra.mxu0 0.0
    %64 = vmatprep.subr.mxu0 0.0
    %65 = vmatpush1.msra.mxu0 0.0
    %66 = vmatprep.subr.mxu0 0.0
    %67 = vmatpush1.msra.mxu0 0.0
    %68 = vmatprep.subr.mxu0 0.0
    %69 = vmatpush1.msra.mxu0 0.0
    %70 = vmatprep.subr.mxu0 0.0
    %71 = vmatpush1.msra.mxu0 0.0
    %72 = vmatprep.subr.mxu0 0.0
    %73 = vmatpush1.msra.mxu0 0.0
    %74 = vmatprep.subr.mxu0 0.0
    %75 = vmatpush1.msra.mxu0 0.0
    %76 = vmatprep.subr.mxu0 0.0
    %77 = vmatpush1.msra.mxu0 0.0
    %78 = vmatprep.subr.mxu0 0.0
    %79 = vmatpush1.msra.mxu0 0.0
    %80 = vmatprep.subr.mxu0 0.0
    %81 = vmatpush1.msra.mxu0 0.0
    %82 = vmatprep.subr.mxu0 0.0
    %83 = vmatpush1.msra.mxu0 0.0
    %84 = vmatprep.subr.mxu0 0.0
    %85 = vmatpush1.msra.mxu0 0.0
    %86 = vmatprep.subr.mxu0 0.0
    %87 = vmatpush1.msra.mxu0 0.0
    %88 = vmatprep.subr.mxu0 0.0
    %89 = vmatpush1.msra.mxu0 0.0
    %90 = vmatprep.subr.mxu0 0.0
    %91 = vmatpush1.msra.mxu0 0.0
    %92 = vmatprep.subr.mxu0 0.0
    %93 = vmatpush1.msra.mxu0 0.0
    %94 = vmatprep.mubr.f32.mxu0 0.0
    %95 = vmatmul.mubr.f32.gmra.mrb[0].mxu0 %v28
    %v96 = vpop.f32.mrb[0].mxu0
    %v97 = vadd.f32 0.0, %v96
    %v98 = vpop.f32.mrb[0].mxu0
    %99 = vdwg.mxu0
    %v100 = vadd.f32 %v20, %v97
    %101 = vst [vmem:[#allocation2] sm:$0xff] %v100
    // Predicated region
    $region18: #{linear_classifier_forward.1} parent=1 // pred_check
      %p102 = pneg %p15
    $region19: #{linear_classifier_forward.1} parent=1 // pred_check_branch
      %104 = sbr.rel (%p102) target = $region21
    $region20: #{linear_classifier_forward.1} parent=1 // pred_region
      %v105 = vld [vmem:[#allocation2] sm:$0xff]
      %v106 = vld [vmem:[%s2] sm:$0x1]
      %v108 = vlaneseq
      %v109 = vshrl.u32 %v108, 7
      %v110 = vsub.s32 0, %v109
      %v111 = vrot.slane %v106, %v110
      %v113 = vadd.f32 %v105, %v111
      %114 = vst [vmem:[#allocation3] sm:$0xff] %v113
    $region21: #{linear_classifier_forward.1} parent=1 // pred_fallthru
      _
    // Predicated region
    $region22: #{linear_classifier_forward.1} parent=1 // pred_check
      _
    $region23: #{linear_classifier_forward.1} parent=1 // pred_check_branch
      %116 = sbr.rel (0) target = $region25
    $region24: #{linear_classifier_forward.1} parent=1 // pred_region
      %s118 = ssub.s32 128, 32
      %119 = vsyncadd [#allocation4], %s118
      %s120 = sshll.u32 [#allocation3], 4
      %s121 = int_to_ptr.vmem [resolvable:$true] %s120
      %126 = dma.vmem_to_hbm [thread:$0]  %s121, 32, %s3, [#allocation4], 32, 32, 2
    $region25: #{linear_classifier_forward.1} parent=1 // pred_fallthru
      _
    // Predicated region
    $region26: #{linear_classifier_forward.1} parent=1 // pred_check
      _
    $region27: #{linear_classifier_forward.1} parent=1 // pred_check_branch
      %128 = sbr.rel (0) target = $region29
    $region28: #{linear_classifier_forward.1} parent=1 // pred_region
      %129 = dma.done [#allocation4], 128
    $region29: #{linear_classifier_forward.1} parent=1 // pred_fallthru
      _
    %130 = vsyncpa [#allocation4], 1

</llo_original>
